<compile_context>
chip_gen: v7x
topology: tpu7x:2x2x1
jax: 0.10.0
libtpu: 0.0.40
codegen_flags: <defaults>
</compile_context>

<pallas_src>
import functools
import math

import jax
import jax.numpy as jnp
from jax.experimental import pallas as pl
from jax.experimental.pallas import tpu as pltpu


def _round_up(x, m):
    return (x + m - 1) // m * m


# ----------------------------------------------------------------------------
# Pallas kernel: fully fused MLP.
#   refs = (x, w0, b0, w1, b1, ..., w_{L-1}, b_{L-1}, out)
# Shapes are pre-padded: x (TB, D0_pad) bf16, w_i (Din_pad, Dout_pad) bf16,
# b_i (1, Dout_pad) f32, out (TB, DL_pad) f32; TB % 8 == 0, *_pad % 128 == 0.
# ----------------------------------------------------------------------------
def _fused_mlp_kernel(*refs, activations):
    x_ref = refs[0]
    o_ref = refs[-1]
    wb = refs[1:-1]

    h = x_ref[...]                                       # (TB, D0_pad) bf16
    for li, act in enumerate(activations):
        w = wb[2 * li][...]                              # (Din_pad, Dout_pad) bf16
        b = wb[2 * li + 1][...]                          # (1, Dout_pad) f32
        h = jnp.dot(h.astype(jnp.bfloat16), w,
                    preferred_element_type=jnp.float32) + b
        if act == "relu":
            h = jnp.maximum(h, 0.0)
        elif act == "sigmoid":
            # exp rides the EUP; approx reciprocal also goes to the EUP, so the
            # sigmoid epilogue over the largest tensor adds no VALU pressure.
            h = pl.reciprocal(1.0 + jnp.exp(-h), approx=True)
        # act == "none": identity
    o_ref[...] = h.astype(o_ref.dtype)


def fused_mlp(x_pad, padded_params, activations, tile_b):
    """One pallas_call running the whole MLP on padded (B_pad, D_pad) inputs."""
    b_pad, d0_pad = x_pad.shape
    dout_pad = padded_params[-1][0].shape[1]
    assert b_pad % tile_b == 0
    n_tiles = b_pad // tile_b

    kernel = functools.partial(_fused_mlp_kernel, activations=tuple(activations))

    flops = 2 * b_pad * sum(w.shape[0] * w.shape[1] for w, _ in padded_params)
    bytes_accessed = (
        x_pad.size * x_pad.dtype.itemsize
        + sum(w.size * w.dtype.itemsize + b.size * b.dtype.itemsize
              for w, b in padded_params)
        + b_pad * dout_pad * 4
    )
    transcendentals = b_pad * dout_pad  # exp in the final sigmoid

    # TODO(synk): for d_tri_pad >= ~4-8K with wide hidden layers, whole-weight
    # residency overflows v7x's 64 MiB VMEM; add a K-reduction grid axis
    # ("arbitrary") with an f32 VMEM accumulator + pl.when init/finalize.

    def run(single_buffer_weights):
        wkw = {}
        weight_bufs = 2
        if single_buffer_weights and hasattr(pl, "Buffered"):
            # Grid-invariant weights don't need a second pipeline buffer.
            wkw = dict(pipeline_mode=pl.Buffered(1))
            weight_bufs = 1

        in_specs = [pl.BlockSpec((tile_b, d0_pad), lambda i: (i, 0))]
        args = [x_pad]
        for w, b in padded_params:
            in_specs.append(pl.BlockSpec(w.shape, lambda i: (0, 0), **wkw))
            in_specs.append(pl.BlockSpec(b.shape, lambda i: (0, 0), **wkw))
            args.append(w)
            args.append(b)

        # Explicit VMEM budget: weights x buffer_count + double-buffered
        # in/out tiles + in-body temporaries, with headroom, clamped to a
        # v7x-safe ceiling (< 64 MiB physical) and >= the default limits.
        weight_bytes = weight_bufs * sum(
            w.size * w.dtype.itemsize + b.size * b.dtype.itemsize
            for w, b in padded_params)
        act_bytes = (2 * tile_b * d0_pad * x_pad.dtype.itemsize
                     + 2 * tile_b * dout_pad * 4)
        body_bytes = 2 * tile_b * max(w.shape[1] for w, _ in padded_params) * 4
        vmem_limit = int(1.5 * (weight_bytes + act_bytes + body_bytes)) + (4 << 20)
        vmem_limit = max(32 << 20, min(vmem_limit, 48 << 20))

        return pl.pallas_call(
            kernel,
            out_shape=jax.ShapeDtypeStruct((b_pad, dout_pad), jnp.float32),
            grid=(n_tiles,),
            in_specs=in_specs,
            out_specs=pl.BlockSpec((tile_b, dout_pad), lambda i: (i, 0)),
            compiler_params=pltpu.CompilerParams(
                # batch tiles are independent -> shard across TensorCores.
                # TODO(synk): if plain "parallel" does not engage v7x's second
                # TC on this toolchain, switch to pltpu.CORE_PARALLEL.
                dimension_semantics=("parallel",),
                vmem_limit_bytes=vmem_limit,
            ),
            cost_estimate=pl.CostEstimate(
                flops=flops,
                transcendentals=transcendentals,
                bytes_accessed=bytes_accessed,
            ),
        )(*args)

    try:
        return run(True)
    except Exception:
        # TODO(synk): pipeline_mode=pl.Buffered(1) rejected on this jax build;
        # fall back to default double-buffered weight blocks.
        return run(False)


# ----------------------------------------------------------------------------
# GraphEmbedding module (forward only), parameters built deterministically.
# ----------------------------------------------------------------------------
class GraphEmbedding:
    def __init__(self, num_nodes, embeddings_hidden_layers, key):
        self.num_nodes = num_nodes
        d_tri = num_nodes * (num_nodes - 1) // 2
        self.d_tri = d_tri
        self.d_tri_pad = _round_up(d_tri, 128)

        # Layer dims:  d_tri -> hidden[0] -> ... -> hidden[-1] -> d_tri
        dims = [d_tri] + list(embeddings_hidden_layers) + [d_tri]
        self.params = []         # canonical f32 copies (reference truth)
        self.padded_params = []  # lane/sublane-padded bf16 weights for the kernel
        for li in range(len(dims) - 1):
            din, dout = dims[li], dims[li + 1]
            key, kw, kb = jax.random.split(key, 3)
            # PyTorch nn.Linear default init: U(-1/sqrt(in), 1/sqrt(in))
            bound = 1.0 / math.sqrt(din)
            w = jax.random.uniform(kw, (din, dout), jnp.float32, -bound, bound)
            b = jax.random.uniform(kb, (1, dout), jnp.float32, -bound, bound)
            # Canonical weights are bf16-quantized (halves weight DMA / VMEM
            # residency; biggest win on v7x's 64 MiB VMEM).  Their f32 upcast
            # is what the reference uses, keeping kernel vs. reference tight.
            w_bf16 = w.astype(jnp.bfloat16)
            self.params.append((w_bf16.astype(jnp.float32), b))

            din_p, dout_p = _round_up(din, 128), _round_up(dout, 128)
            w_p = jnp.zeros((din_p, dout_p), jnp.bfloat16).at[:din, :dout].set(w_bf16)
            b_p = jnp.zeros((1, dout_p), jnp.float32).at[:, :dout].set(b)
            self.padded_params.append((w_p, b_p))

        # ReLU on hidden layers, Sigmoid on the output layer.
        self.activations = ["relu"] * len(embeddings_hidden_layers) + ["sigmoid"]

        # Strict upper-triangular indices (row-major, == torch.triu_indices(N,N,1)).
        iu = jnp.triu_indices(num_nodes, k=1)
        self.idx0, self.idx1 = iu[0], iu[1]

    def __call__(self, adj):
        # adj: (B, N, N) float32
        B = adj.shape[0]

        # --- gather strict upper triangle -> (B, d_tri) ---------------- glue
        # TODO(synk): for large N, move the (B,N,N)<->(B,D) triu pack/unpack
        # into the Pallas prologue/epilogue instead of XLA gather/scatter HLOs.
        x = adj[:, self.idx0, self.idx1]

        # --- batch tiling: one big tile up to 512 rows, 512-row tiles beyond.
        if B <= 512:
            b_pad = _round_up(B, 8)
            tile_b = b_pad
        else:
            tile_b = 512
            b_pad = _round_up(B, tile_b)

        # --- pad fused onto the gather output (no extra zero-filled HBM copy)
        # and cast to bf16 (halves activation DMA; dot accumulates in f32).
        x_pad = jnp.pad(
            x, ((0, b_pad - B), (0, self.d_tri_pad - self.d_tri))
        ).astype(jnp.bfloat16)

        # --- fused MLP: single Pallas kernel ---------------------------------
        y_pad = fused_mlp(x_pad, self.padded_params, self.activations, tile_b)
        # NOTE: padded lanes of y_pad hold sigmoid(0)=0.5, not 0 -> slice them off.
        y = y_pad[:B, : self.d_tri]

        # --- symmetric write-back: two scatters (matches torch), no full
        # (B,N,N) transpose + add materialized. -------------------------- glue
        adj_new = jnp.zeros_like(adj)
        adj_new = adj_new.at[:, self.idx0, self.idx1].set(y)
        adj_new = adj_new.at[:, self.idx1, self.idx0].set(y)
        return adj_new


# ----------------------------------------------------------------------------
# Pure-JAX reference for correctness checking (original two-scatter semantics).
# ----------------------------------------------------------------------------
def reference_forward(model, adj):
    x = adj[:, model.idx0, model.idx1]
    for (w, b), act in zip(model.params, model.activations):
        x = jnp.dot(x, w, precision=jax.lax.Precision.HIGHEST) + b
        if act == "relu":
            x = jnp.maximum(x, 0.0)
        elif act == "sigmoid":
            x = jax.nn.sigmoid(x)
    adj_new = jnp.zeros_like(adj)
    adj_new = adj_new.at[:, model.idx0, model.idx1].set(x)
    adj_new = adj_new.at[:, model.idx1, model.idx0].set(x)
    return adj_new


if __name__ == "__main__":
    key = jax.random.PRNGKey(0)
    k_param, k_adj = jax.random.split(key)

    num_nodes = 16                      # d_tri = 16*15/2 = 120 triu features
    hidden_layers = [32]                # one hidden layer of width 32
    batch = 2

    model = GraphEmbedding(num_nodes, hidden_layers, k_param)

    # Deterministic symmetric input adjacency (values in [0,1], zero diag).
    a = jax.random.uniform(k_adj, (batch, num_nodes, num_nodes), jnp.float32)
    adj = 0.5 * (a + jnp.transpose(a, (0, 2, 1)))
    adj = adj * (1.0 - jnp.eye(num_nodes, dtype=jnp.float32))

    out = jax.block_until_ready(model(adj))
    ref = jax.block_until_ready(reference_forward(model, adj))

    assert out.shape == adj.shape and out.dtype == adj.dtype
    # bf16 activations/weights in the kernel vs f32 reference + approx
    # reciprocal -> a few 1e-4 of drift on values in [0, 1].
    assert jnp.allclose(out, ref, atol=3e-3, rtol=3e-3), "mismatch vs reference"
    # output must be symmetric with zero diagonal
    assert jnp.allclose(out, jnp.transpose(out, (0, 2, 1)), atol=1e-6)
    assert jnp.allclose(jnp.diagonal(out, axis1=1, axis2=2), 0.0)

    print("KERNEL_OK")
</pallas_src>

<mosaic_0001>
module attributes {stable_mosaic.version = 11 : i64} {
  func.func @_fused_mlp_kernel(%arg0: i32, %arg1: memref<8x128xbf16, #tpu.memory_space<vmem>>, %arg2: memref<128x128xbf16, #tpu.memory_space<vmem>>, %arg3: memref<1x128xf32, #tpu.memory_space<vmem>>, %arg4: memref<128x128xbf16, #tpu.memory_space<vmem>>, %arg5: memref<1x128xf32, #tpu.memory_space<vmem>>, %arg6: memref<8x128xf32, #tpu.memory_space<vmem>>) attributes {dimension_semantics = [#tpu.dimension_semantics<parallel>], iteration_bounds = array<i64: 1>, scalar_prefetch = 0 : i64, scratch_operands = 0 : i64, tpu.core_type = #tpu.core_type<tc>, window_params = [{transform_indices = @transform_0, window_bounds = array<i64: 8, 128>}, {pipeline_mode = #tpu.pipeline_mode<synchronous>, transform_indices = @transform_1, window_bounds = array<i64: 128, 128>}, {pipeline_mode = #tpu.pipeline_mode<synchronous>, transform_indices = @transform_2, window_bounds = array<i64: 1, 128>}, {pipeline_mode = #tpu.pipeline_mode<synchronous>, transform_indices = @transform_3, window_bounds = array<i64: 128, 128>}, {pipeline_mode = #tpu.pipeline_mode<synchronous>, transform_indices = @transform_4, window_bounds = array<i64: 1, 128>}, {transform_indices = @transform_5, window_bounds = array<i64: 8, 128>}]} {
    %c0 = arith.constant 0 : index
    %c0_0 = arith.constant 0 : index
    %0 = vector.load %arg1[%c0, %c0_0] : memref<8x128xbf16, #tpu.memory_space<vmem>>, vector<8x128xbf16>
    %c0_1 = arith.constant 0 : index
    %c0_2 = arith.constant 0 : index
    %1 = vector.load %arg2[%c0_1, %c0_2] : memref<128x128xbf16, #tpu.memory_space<vmem>>, vector<128x128xbf16>
    %c0_3 = arith.constant 0 : index
    %c0_4 = arith.constant 0 : index
    %2 = vector.load %arg3[%c0_3, %c0_4] : memref<1x128xf32, #tpu.memory_space<vmem>>, vector<1x128xf32>
    %cst = arith.constant dense<0.000000e+00> : vector<8x128xf32>
    %3 = tpu.matmul %0, %1, %cst {dimension_numbers = #tpu.dot_dimension_numbers<[1], [0], [0], [1], [0, 0, 1, 1], [], []>} : vector<8x128xbf16>, vector<128x128xbf16>, vector<8x128xf32> -> vector<8x128xf32>
    %4 = vector.broadcast %2 : vector<1x128xf32> to vector<8x128xf32>
    %5 = arith.addf %3, %4 : vector<8x128xf32>
    %cst_5 = arith.constant 0.000000e+00 : f32
    %6 = vector.broadcast %cst_5 : f32 to vector<8x128xf32>
    %7 = arith.maximumf %5, %6 : vector<8x128xf32>
    %c0_6 = arith.constant 0 : index
    %c0_7 = arith.constant 0 : index
    %8 = vector.load %arg4[%c0_6, %c0_7] : memref<128x128xbf16, #tpu.memory_space<vmem>>, vector<128x128xbf16>
    %c0_8 = arith.constant 0 : index
    %c0_9 = arith.constant 0 : index
    %9 = vector.load %arg5[%c0_8, %c0_9] : memref<1x128xf32, #tpu.memory_space<vmem>>, vector<1x128xf32>
    %10 = arith.truncf %7 : vector<8x128xf32> to vector<8x128xbf16>
    %cst_10 = arith.constant dense<0.000000e+00> : vector<8x128xf32>
    %11 = tpu.matmul %10, %8, %cst_10 {dimension_numbers = #tpu.dot_dimension_numbers<[1], [0], [0], [1], [0, 0, 1, 1], [], []>} : vector<8x128xbf16>, vector<128x128xbf16>, vector<8x128xf32> -> vector<8x128xf32>
    %12 = vector.broadcast %9 : vector<1x128xf32> to vector<8x128xf32>
    %13 = arith.addf %11, %12 : vector<8x128xf32>
    %cst_11 = arith.constant 0.000000e+00 : f32
    %14 = vector.broadcast %cst_11 : f32 to vector<8x128xf32>
    %15 = arith.subf %14, %13 : vector<8x128xf32>
    %16 = math.exp %15 : vector<8x128xf32>
    %cst_12 = arith.constant 1.000000e+00 : f32
    %17 = vector.broadcast %cst_12 : f32 to vector<8x128xf32>
    %18 = arith.addf %17, %16 : vector<8x128xf32>
    %19 = tpu.reciprocal %18 {approx = true} : vector<8x128xf32> -> vector<8x128xf32>
    %c0_13 = arith.constant 0 : index
    %c0_14 = arith.constant 0 : index
    %20 = vector.load %arg6[%c0_13, %c0_14] : memref<8x128xf32, #tpu.memory_space<vmem>>, vector<8x128xf32>
    tpu.vector_store %arg6[%c0_13, %c0_14], %19 {strides = array<i32>} : memref<8x128xf32, #tpu.memory_space<vmem>>, vector<8x128xf32>,
    return
  }
  func.func @transform_0(%arg0: i32) -> (i32, i32) {
    %c0_i32 = arith.constant 0 : i32
    %c0_i32_0 = arith.constant 0 : i32
    return %arg0, %c0_i32 : i32, i32
  }
  func.func @transform_1(%arg0: i32) -> (i32, i32) {
    %c0_i32 = arith.constant 0 : i32
    %c0_i32_0 = arith.constant 0 : i32
    %c0_i32_1 = arith.constant 0 : i32
    return %c0_i32, %c0_i32_0 : i32, i32
  }
  func.func @transform_2(%arg0: i32) -> (i32, i32) {
    %c0_i32 = arith.constant 0 : i32
    %c0_i32_0 = arith.constant 0 : i32
    %c0_i32_1 = arith.constant 0 : i32
    return %c0_i32, %c0_i32_0 : i32, i32
  }
  func.func @transform_3(%arg0: i32) -> (i32, i32) {
    %c0_i32 = arith.constant 0 : i32
    %c0_i32_0 = arith.constant 0 : i32
    %c0_i32_1 = arith.constant 0 : i32
    return %c0_i32, %c0_i32_0 : i32, i32
  }
  func.func @transform_4(%arg0: i32) -> (i32, i32) {
    %c0_i32 = arith.constant 0 : i32
    %c0_i32_0 = arith.constant 0 : i32
    %c0_i32_1 = arith.constant 0 : i32
    return %c0_i32, %c0_i32_0 : i32, i32
  }
  func.func @transform_5(%arg0: i32) -> (i32, i32) {
    %c0_i32 = arith.constant 0 : i32
    %c0_i32_0 = arith.constant 0 : i32
    return %arg0, %c0_i32 : i32, i32
  }
}

module attributes {stable_mosaic.version = 11 : i64} {
  func.func @_fused_mlp_kernel(%arg0: i32, %arg1: memref<8x128xbf16, #tpu.memory_space<vmem>>, %arg2: memref<128x128xbf16, #tpu.memory_space<vmem>>, %arg3: memref<1x128xf32, #tpu.memory_space<vmem>>, %arg4: memref<128x128xbf16, #tpu.memory_space<vmem>>, %arg5: memref<1x128xf32, #tpu.memory_space<vmem>>, %arg6: memref<8x128xf32, #tpu.memory_space<vmem>>) attributes {dimension_semantics = [#tpu.dimension_semantics<parallel>], iteration_bounds = array<i64: 1>, scalar_prefetch = 0 : i64, scratch_operands = 0 : i64, tpu.core_type = #tpu.core_type<tc>, window_params = [{transform_indices = @transform_0, window_bounds = array<i64: 8, 128>}, {pipeline_mode = #tpu.pipeline_mode<synchronous>, transform_indices = @transform_1, window_bounds = array<i64: 128, 128>}, {pipeline_mode = #tpu.pipeline_mode<synchronous>, transform_indices = @transform_2, window_bounds = array<i64: 1, 128>}, {pipeline_mode = #tpu.pipeline_mode<synchronous>, transform_indices = @transform_3, window_bounds = array<i64: 128, 128>}, {pipeline_mode = #tpu.pipeline_mode<synchronous>, transform_indices = @transform_4, window_bounds = array<i64: 1, 128>}, {transform_indices = @transform_5, window_bounds = array<i64: 8, 128>}]} {
    %c0 = arith.constant 0 : index
    %c0_0 = arith.constant 0 : index
    %0 = vector.load %arg1[%c0, %c0_0] : memref<8x128xbf16, #tpu.memory_space<vmem>>, vector<8x128xbf16>
    %c0_1 = arith.constant 0 : index
    %c0_2 = arith.constant 0 : index
    %1 = vector.load %arg2[%c0_1, %c0_2] : memref<128x128xbf16, #tpu.memory_space<vmem>>, vector<128x128xbf16>
    %c0_3 = arith.constant 0 : index
    %c0_4 = arith.constant 0 : index
    %2 = vector.load %arg3[%c0_3, %c0_4] : memref<1x128xf32, #tpu.memory_space<vmem>>, vector<1x128xf32>
    %cst = arith.constant dense<0.000000e+00> : vector<8x128xf32>
    %3 = tpu.matmul %0, %1, %cst {dimension_numbers = #tpu.dot_dimension_numbers<[1], [0], [0], [1], [0, 0, 1, 1], [], []>} : vector<8x128xbf16>, vector<128x128xbf16>, vector<8x128xf32> -> vector<8x128xf32>
    %4 = vector.broadcast %2 : vector<1x128xf32> to vector<8x128xf32>
    %5 = arith.addf %3, %4 : vector<8x128xf32>
    %cst_5 = arith.constant 0.000000e+00 : f32
    %6 = vector.broadcast %cst_5 : f32 to vector<8x128xf32>
    %7 = arith.maximumf %5, %6 : vector<8x128xf32>
    %c0_6 = arith.constant 0 : index
    %c0_7 = arith.constant 0 : index
    %8 = vector.load %arg4[%c0_6, %c0_7] : memref<128x128xbf16, #tpu.memory_space<vmem>>, vector<128x128xbf16>
    %c0_8 = arith.constant 0 : index
    %c0_9 = arith.constant 0 : index
    %9 = vector.load %arg5[%c0_8, %c0_9] : memref<1x128xf32, #tpu.memory_space<vmem>>, vector<1x128xf32>
    %10 = arith.truncf %7 : vector<8x128xf32> to vector<8x128xbf16>
    %cst_10 = arith.constant dense<0.000000e+00> : vector<8x128xf32>
    %11 = tpu.matmul %10, %8, %cst_10 {dimension_numbers = #tpu.dot_dimension_numbers<[1], [0], [0], [1], [0, 0, 1, 1], [], []>} : vector<8x128xbf16>, vector<128x128xbf16>, vector<8x128xf32> -> vector<8x128xf32>
    %12 = vector.broadcast %9 : vector<1x128xf32> to vector<8x128xf32>
    %13 = arith.addf %11, %12 : vector<8x128xf32>
    %cst_11 = arith.constant 0.000000e+00 : f32
    %14 = vector.broadcast %cst_11 : f32 to vector<8x128xf32>
    %15 = arith.subf %14, %13 : vector<8x128xf32>
    %16 = math.exp %15 : vector<8x128xf32>
    %cst_12 = arith.constant 1.000000e+00 : f32
    %17 = vector.broadcast %cst_12 : f32 to vector<8x128xf32>
    %18 = arith.addf %17, %16 : vector<8x128xf32>
    %19 = tpu.reciprocal %18 {approx = true} : vector<8x128xf32> -> vector<8x128xf32>
    %c0_13 = arith.constant 0 : index
    %c0_14 = arith.constant 0 : index
    %20 = vector.load %arg6[%c0_13, %c0_14] : memref<8x128xf32, #tpu.memory_space<vmem>>, vector<8x128xf32>
    tpu.vector_store %arg6[%c0_13, %c0_14], %19 {strides = array<i32>} : memref<8x128xf32, #tpu.memory_space<vmem>>, vector<8x128xf32>,
    return
  }
  func.func @transform_0(%arg0: i32) -> (i32, i32) {
    %c0_i32 = arith.constant 0 : i32
    %c0_i32_0 = arith.constant 0 : i32
    return %arg0, %c0_i32 : i32, i32
  }
  func.func @transform_1(%arg0: i32) -> (i32, i32) {
    %c0_i32 = arith.constant 0 : i32
    %c0_i32_0 = arith.constant 0 : i32
    %c0_i32_1 = arith.constant 0 : i32
    return %c0_i32, %c0_i32_0 : i32, i32
  }
  func.func @transform_2(%arg0: i32) -> (i32, i32) {
    %c0_i32 = arith.constant 0 : i32
    %c0_i32_0 = arith.constant 0 : i32
    %c0_i32_1 = arith.constant 0 : i32
    return %c0_i32, %c0_i32_0 : i32, i32
  }
  func.func @transform_3(%arg0: i32) -> (i32, i32) {
    %c0_i32 = arith.constant 0 : i32
    %c0_i32_0 = arith.constant 0 : i32
    %c0_i32_1 = arith.constant 0 : i32
    return %c0_i32, %c0_i32_0 : i32, i32
  }
  func.func @transform_4(%arg0: i32) -> (i32, i32) {
    %c0_i32 = arith.constant 0 : i32
    %c0_i32_0 = arith.constant 0 : i32
    %c0_i32_1 = arith.constant 0 : i32
    return %c0_i32, %c0_i32_0 : i32, i32
  }
  func.func @transform_5(%arg0: i32) -> (i32, i32) {
    %c0_i32 = arith.constant 0 : i32
    %c0_i32_0 = arith.constant 0 : i32
    return %arg0, %c0_i32 : i32, i32
  }
}

</mosaic_0001>

<llo_original>
// kernel: tpu_custom_call.1
$region0: #{tpu_custom_call.1}
  #allocation0 [shape = 'u32[]', space=smem, size = 0x4, offset = 0x4, fixed_abs, tag = 'smem constant byte address 0x4 - core index']
  #allocation1 [shape = 'u32[144,128]{1,0:T(1,128)}', space=vmem, size = 0x12000, scoped, tag = 'internal scratch']
  %s0 = inlined_call_operand.hbm [shape: bf16[8,128], index: 0, kind: input, shape index: {}]
  %s1 = inlined_call_operand.hbm [shape: bf16[128,128], index: 1, kind: input, shape index: {}]
  %s2 = inlined_call_operand.vmem [shape: f32[1,128], index: 2, kind: input, shape index: {}]
  %s3 = inlined_call_operand.hbm [shape: bf16[128,128], index: 3, kind: input, shape index: {}]
  %s4 = inlined_call_operand.vmem [shape: f32[1,128], index: 4, kind: input, shape index: {}]
  %s5 = inlined_call_operand.hbm [shape: f32[8,128], index: 5, kind: output, shape index: {}]
  %s6 = sld [smem:[#allocation0]]
  $region42: #{tpu_custom_call.1} parent=0
    _
  %s8 = ssub.s32 1, %s6
  %s9 = scalar_select 0, %s8, %s6
  $region1: #{tpu_custom_call.1} parent=0
    #allocation2 [shape = 'u8[2048]{0}', space=vmem, size = 0x800, scoped, tag = 'input window, operand 0, single buffered']
    #allocation3 [shape = 's32[1]{0}', space=sflag, size = 0x4, scoped, tag = 'scoped memory for tpu_custom_call.1']
    #allocation4 [shape = 's32[1]{0}', space=sflag, size = 0x4, scoped, tag = 'scoped memory for tpu_custom_call.1']
    #allocation5 [shape = 'u8[32768]{0}', space=vmem, size = 0x8000, scoped, tag = 'input window, operand 1, single buffered']
    #allocation6 [shape = 's32[1]{0}', space=sflag, size = 0x4, scoped, tag = 'scoped memory for tpu_custom_call.1']
    #allocation7 [shape = 'u8[32768]{0}', space=vmem, size = 0x8000, scoped, tag = 'input window, operand 3, single buffered']
    #allocation8 [shape = 'u8[4096]{0}', space=vmem, size = 0x1000, scoped, tag = 'output window, operand 0, single buffered']
    %10 = vsyncpa [#allocation3], 0
    %11 = vsyncpa [#allocation6], 0
    %12 = vsyncpa [#allocation4], 0
    // Predicated region
    $region2: #{tpu_custom_call.1} parent=1 // pred_check
      _
    $region3: #{tpu_custom_call.1} parent=1 // pred_check_branch
      %14 = sbr.rel (0) target = $region5
    $region4: #{tpu_custom_call.1} parent=1 // pred_region
      %s16 = ssub.s32 64, 64
      %17 = vsyncadd [#allocation3], %s16
      %s19 = sshll.u32 [#allocation2], 4
      %s20 = int_to_ptr.vmem [resolvable:$true] %s19
      %22 = dma.hbm_to_vmem [thread:$0]  %s0, 64, %s20, [#allocation3]
    $region5: #{tpu_custom_call.1} parent=1 // pred_fallthru
      _
    // Predicated region
    $region6: #{tpu_custom_call.1} parent=1 // pred_check
      _
    $region7: #{tpu_custom_call.1} parent=1 // pred_check_branch
      %24 = sbr.rel (0) target = $region9
    $region8: #{tpu_custom_call.1} parent=1 // pred_region
      %s26 = ssub.s32 1024, 1024
      %27 = vsyncadd [#allocation6], %s26
      %s28 = sshll.u32 [#allocation5], 4
      %s29 = int_to_ptr.vmem [resolvable:$true] %s28
      %34 = dma.hbm_to_vmem [thread:$0]  %s1, 1024, %s29, [#allocation6], 64, 64, 4
    $region9: #{tpu_custom_call.1} parent=1 // pred_fallthru
      _
    // Predicated region
    $region10: #{tpu_custom_call.1} parent=1 // pred_check
      _
    $region11: #{tpu_custom_call.1} parent=1 // pred_check_branch
      %36 = sbr.rel (0) target = $region13
    $region12: #{tpu_custom_call.1} parent=1 // pred_region
      _
    $region13: #{tpu_custom_call.1} parent=1 // pred_fallthru
      _
    // Predicated region
    $region14: #{tpu_custom_call.1} parent=1 // pred_check
      _
    $region15: #{tpu_custom_call.1} parent=1 // pred_check_branch
      %38 = sbr.rel (0) target = $region17
    $region16: #{tpu_custom_call.1} parent=1 // pred_region
      %s40 = ssub.s32 1024, 1024
      %41 = vsyncadd [#allocation6], %s40
      %s42 = sshll.u32 [#allocation7], 4
      %s43 = int_to_ptr.vmem [resolvable:$true] %s42
      %48 = dma.hbm_to_vmem [thread:$0]  %s3, 1024, %s43, [#allocation6], 64, 64, 4
    $region17: #{tpu_custom_call.1} parent=1 // pred_fallthru
      _
    // Predicated region
    $region18: #{tpu_custom_call.1} parent=1 // pred_check
      _
    $region19: #{tpu_custom_call.1} parent=1 // pred_check_branch
      %50 = sbr.rel (0) target = $region21
    $region20: #{tpu_custom_call.1} parent=1 // pred_region
      _
    $region21: #{tpu_custom_call.1} parent=1 // pred_fallthru
      _
    // Predicated region
    $region22: #{tpu_custom_call.1} parent=1 // pred_check
      _
    $region23: #{tpu_custom_call.1} parent=1 // pred_check_branch
      %52 = sbr.rel (0) target = $region25
    $region24: #{tpu_custom_call.1} parent=1 // pred_region
      %53 = dma.done [#allocation3], 64
    $region25: #{tpu_custom_call.1} parent=1 // pred_fallthru
      _
    // Predicated region
    $region26: #{tpu_custom_call.1} parent=1 // pred_check
      _
    $region27: #{tpu_custom_call.1} parent=1 // pred_check_branch
      %55 = sbr.rel (0) target = $region29
    $region28: #{tpu_custom_call.1} parent=1 // pred_region
      %56 = dma.done [#allocation6], 1024
    $region29: #{tpu_custom_call.1} parent=1 // pred_fallthru
      _
    // Predicated region
    $region30: #{tpu_custom_call.1} parent=1 // pred_check
      _
    $region31: #{tpu_custom_call.1} parent=1 // pred_check_branch
      %58 = sbr.rel (0) target = $region33
    $region32: #{tpu_custom_call.1} parent=1 // pred_region
      %59 = dma.done [#allocation6], 1024
    $region33: #{tpu_custom_call.1} parent=1 // pred_fallthru
      _
    %v61 = vld [vmem:[#allocation2] sm:$0xf]
    %v62 = vld [vmem:[#allocation5] sm:$0xf]
    %v63 = vld [vmem:[#allocation5 + $0x4] sm:$0xf]
    %v64 = vld [vmem:[#allocation5 + $0x8] sm:$0xf]
    %v65 = vld [vmem:[#allocation5 + $0xc] sm:$0xf]
    %v66 = vld [vmem:[#allocation5 + $0x10] sm:$0xf]
    %v67 = vld [vmem:[#allocation5 + $0x14] sm:$0xf]
    %v68 = vld [vmem:[#allocation5 + $0x18] sm:$0xf]
    %v69 = vld [vmem:[#allocation5 + $0x1c] sm:$0xf]
    %v70 = vld [vmem:[#allocation5 + $0x20] sm:$0xf]
    %v71 = vld [vmem:[#allocation5 + $0x24] sm:$0xf]
    %v72 = vld [vmem:[#allocation5 + $0x28] sm:$0xf]
    %v73 = vld [vmem:[#allocation5 + $0x2c] sm:$0xf]
    %v74 = vld [vmem:[#allocation5 + $0x30] sm:$0xf]
    %v75 = vld [vmem:[#allocation5 + $0x34] sm:$0xf]
    %v76 = vld [vmem:[#allocation5 + $0x38] sm:$0xf]
    %v77 = vld [vmem:[#allocation5 + $0x3c] sm:$0xf]
    %v78 = vld [vmem:[%s2] sm:$0x1]
    %v80 = vlaneseq
    %v81 = vshrl.u32 %v80, 7
    %v82 = vsub.s32 0, %v81
    %v83 = vrot.slane %v78, %v82
    %v101 = vunpack.c.l.b16 %v62
    %v102 = vunpack.c.l.b16 %v63
    %v103 = vunpack.c.l.b16 %v64
    %v104 = vunpack.c.l.b16 %v65
    %v105 = vunpack.c.l.b16 %v66
    %v106 = vunpack.c.l.b16 %v67
    %v107 = vunpack.c.l.b16 %v68
    %v108 = vunpack.c.l.b16 %v69
    %v109 = vunpack.c.l.b16 %v70
    %v110 = vunpack.c.l.b16 %v71
    %v111 = vunpack.c.l.b16 %v72
    %v112 = vunpack.c.l.b16 %v73
    %v113 = vunpack.c.l.b16 %v74
    %v114 = vunpack.c.l.b16 %v75
    %v115 = vunpack.c.l.b16 %v76
    %v116 = vunpack.c.l.b16 %v77
    %v117 = vpack.c.b16 %v102, %v101
    %v118 = vpack.c.b16 %v104, %v103
    %v119 = vpack.c.b16 %v106, %v105
    %v120 = vpack.c.b16 %v108, %v107
    %v121 = vpack.c.b16 %v110, %v109
    %v122 = vpack.c.b16 %v112, %v111
    %v123 = vpack.c.b16 %v114, %v113
    %v124 = vpack.c.b16 %v116, %v115
    %133 = vmatprep.subr.bf16.mxu0 0
    %134 = vmatpush1.bf16.msra.mxu0 %v117
    %135 = vmatprep.subr.bf16.mxu0 0
    %136 = vmatpush1.bf16.msra.mxu0 %v118
    %137 = vmatprep.subr.bf16.mxu0 0
    %138 = vmatpush1.bf16.msra.mxu0 %v119
    %139 = vmatprep.subr.bf16.mxu0 0
    %140 = vmatpush1.bf16.msra.mxu0 %v120
    %141 = vmatprep.subr.bf16.mxu0 0
    %142 = vmatpush1.bf16.msra.mxu0 %v121
    %143 = vmatprep.subr.bf16.mxu0 0
    %144 = vmatpush1.bf16.msra.mxu0 %v122
    %145 = vmatprep.subr.bf16.mxu0 0
    %146 = vmatpush1.bf16.msra.mxu0 %v123
    %147 = vmatprep.subr.bf16.mxu0 0
    %148 = vmatpush1.bf16.msra.mxu0 %v124
    %149 = vmatprep.subr.bf16.mxu0 0
    %150 = vmatpush1.bf16.msra.mxu0 0
    %151 = vmatprep.subr.bf16.mxu0 0
    %152 = vmatpush1.bf16.msra.mxu0 0
    %153 = vmatprep.subr.bf16.mxu0 0
    %154 = vmatpush1.bf16.msra.mxu0 0
    %155 = vmatprep.subr.bf16.mxu0 0
    %156 = vmatpush1.bf16.msra.mxu0 0
    %157 = vmatprep.subr.bf16.mxu0 0
    %158 = vmatpush1.bf16.msra.mxu0 0
    %159 = vmatprep.subr.bf16.mxu0 0
    %160 = vmatpush1.bf16.msra.mxu0 0
    %161 = vmatprep.subr.bf16.mxu0 0
    %162 = vmatpush1.bf16.msra.mxu0 0
    %163 = vmatprep.subr.bf16.mxu0 0
    %164 = vmatpush1.bf16.msra.mxu0 0
    %165 = vmatprep.mubr.bf16.mxu0 0
    %166 = vmatmul.mubr.bf16.gmra.mrb[0].mxu0 %v61
    %v167 = vpop.f32.mrb[0].mxu0
    %v168 = vadd.f32 %v83, %v167
    %v169 = vpop.f32.mrb[0].mxu0
    %v170 = vpop.f32.mrb[0].mxu0
    %v171 = vpop.f32.mrb[0].mxu0
    %172 = vdwg.mxu0
    %v173 = vmax.f32 %v168, 0.0
    %v174 = vld [vmem:[#allocation7] sm:$0xf]
    %v175 = vld [vmem:[#allocation7 + $0x4] sm:$0xf]
    %v176 = vld [vmem:[#allocation7 + $0x8] sm:$0xf]
    %v177 = vld [vmem:[#allocation7 + $0xc] sm:$0xf]
    %v178 = vld [vmem:[#allocation7 + $0x10] sm:$0xf]
    %v179 = vld [vmem:[#allocation7 + $0x14] sm:$0xf]
    %v180 = vld [vmem:[#allocation7 + $0x18] sm:$0xf]
    %v181 = vld [vmem:[#allocation7 + $0x1c] sm:$0xf]
    %v182 = vld [vmem:[#allocation7 + $0x20] sm:$0xf]
    %v183 = vld [vmem:[#allocation7 + $0x24] sm:$0xf]
    %v184 = vld [vmem:[#allocation7 + $0x28] sm:$0xf]
    %v185 = vld [vmem:[#allocation7 + $0x2c] sm:$0xf]
    %v186 = vld [vmem:[#allocation7 + $0x30] sm:$0xf]
    %v187 = vld [vmem:[#allocation7 + $0x34] sm:$0xf]
    %v188 = vld [vmem:[#allocation7 + $0x38] sm:$0xf]
    %v189 = vld [vmem:[#allocation7 + $0x3c] sm:$0xf]
    %v190 = vld [vmem:[%s4] sm:$0x1]
    %v191 = vpack.c.bf16 %v173, %v173
    %v193 = vlaneseq
    %v194 = vshrl.u32 %v193, 7
    %v195 = vsub.s32 0, %v194
    %v196 = vrot.slane %v190, %v195
    %v214 = vunpack.c.l.b16 %v174
    %v215 = vunpack.c.l.b16 %v175
    %v216 = vunpack.c.l.b16 %v176
    %v217 = vunpack.c.l.b16 %v177
    %v218 = vunpack.c.l.b16 %v178
    %v219 = vunpack.c.l.b16 %v179
    %v220 = vunpack.c.l.b16 %v180
    %v221 = vunpack.c.l.b16 %v181
    %v222 = vunpack.c.l.b16 %v182
    %v223 = vunpack.c.l.b16 %v183
    %v224 = vunpack.c.l.b16 %v184
    %v225 = vunpack.c.l.b16 %v185
    %v226 = vunpack.c.l.b16 %v186
    %v227 = vunpack.c.l.b16 %v187
    %v228 = vunpack.c.l.b16 %v188
    %v229 = vunpack.c.l.b16 %v189
    %v230 = vpack.c.b16 %v215, %v214
    %v231 = vpack.c.b16 %v217, %v216
    %v232 = vpack.c.b16 %v219, %v218
    %v233 = vpack.c.b16 %v221, %v220
    %v234 = vpack.c.b16 %v223, %v222
    %v235 = vpack.c.b16 %v225, %v224
    %v236 = vpack.c.b16 %v227, %v226
    %v237 = vpack.c.b16 %v229, %v228
    %246 = vmatprep.subr.bf16.mxu0 0
    %247 = vmatpush1.bf16.msra.mxu0 %v230
    %248 = vmatprep.subr.bf16.mxu0 0
    %249 = vmatpush1.bf16.msra.mxu0 %v231
    %250 = vmatprep.subr.bf16.mxu0 0
    %251 = vmatpush1.bf16.msra.mxu0 %v232
    %252 = vmatprep.subr.bf16.mxu0 0
    %253 = vmatpush1.bf16.msra.mxu0 %v233
    %254 = vmatprep.subr.bf16.mxu0 0
    %255 = vmatpush1.bf16.msra.mxu0 %v234
    %256 = vmatprep.subr.bf16.mxu0 0
    %257 = vmatpush1.bf16.msra.mxu0 %v235
    %258 = vmatprep.subr.bf16.mxu0 0
    %259 = vmatpush1.bf16.msra.mxu0 %v236
    %260 = vmatprep.subr.bf16.mxu0 0
    %261 = vmatpush1.bf16.msra.mxu0 %v237
    %262 = vmatprep.subr.bf16.mxu0 0
    %263 = vmatpush1.bf16.msra.mxu0 0
    %264 = vmatprep.subr.bf16.mxu0 0
    %265 = vmatpush1.bf16.msra.mxu0 0
    %266 = vmatprep.subr.bf16.mxu0 0
    %267 = vmatpush1.bf16.msra.mxu0 0
    %268 = vmatprep.subr.bf16.mxu0 0
    %269 = vmatpush1.bf16.msra.mxu0 0
    %270 = vmatprep.subr.bf16.mxu0 0
    %271 = vmatpush1.bf16.msra.mxu0 0
    %272 = vmatprep.subr.bf16.mxu0 0
    %273 = vmatpush1.bf16.msra.mxu0 0
    %274 = vmatprep.subr.bf16.mxu0 0
    %275 = vmatpush1.bf16.msra.mxu0 0
    %276 = vmatprep.subr.bf16.mxu0 0
    %277 = vmatpush1.bf16.msra.mxu0 0
    %278 = vmatprep.mubr.bf16.mxu0 0
    %279 = vmatmul.mubr.bf16.gmra.mrb[0].mxu0 %v191
    %v280 = vpop.f32.mrb[0].mxu0
    %v281 = vadd.f32 %v196, %v280
    %v282 = vpop.f32.mrb[0].mxu0
    %v283 = vpop.f32.mrb[0].mxu0
    %v284 = vpop.f32.mrb[0].mxu0
    %285 = vdwg.mxu0
    %v286 = vsub.f32 0.0, %v281
    %v287 = vmul.f32 %v286, 1.442695
    %v288 = vpow.pop %v287
    %v289 = vadd.f32 %v288, 1.0
    %v290 = vrcp.pop %v289
    %291 = vst [vmem:[#allocation8] sm:$0xff] %v290
    // Predicated region
    $region34: #{tpu_custom_call.1} parent=1 // pred_check
      _
    $region35: #{tpu_custom_call.1} parent=1 // pred_check_branch
      %293 = sbr.rel (0) target = $region37
    $region36: #{tpu_custom_call.1} parent=1 // pred_region
      %s295 = ssub.s32 128, 128
      %296 = vsyncadd [#allocation4], %s295
      %s298 = sshll.u32 [#allocation8], 4
      %s299 = int_to_ptr.vmem [resolvable:$true] %s298
      %301 = dma.vmem_to_hbm [thread:$0]  %s299, 128, %s5, [#allocation4]
    $region37: #{tpu_custom_call.1} parent=1 // pred_fallthru
      _
    // Predicated region
    $region38: #{tpu_custom_call.1} parent=1 // pred_check
      _
    $region39: #{tpu_custom_call.1} parent=1 // pred_check_branch
      %303 = sbr.rel (0) target = $region41
    $region40: #{tpu_custom_call.1} parent=1 // pred_region
      %304 = dma.done [#allocation4], 128
    $region41: #{tpu_custom_call.1} parent=1 // pred_fallthru
      _
    %305 = vsyncpa [#allocation3], 1
    %306 = vsyncpa [#allocation6], 1
    %307 = vsyncpa [#allocation4], 1

// kernel: tpu_custom_call.1
$region0: #{tpu_custom_call.1}
  #allocation0 [shape = 'u32[]', space=smem, size = 0x4, offset = 0x4, fixed_abs, tag = 'smem constant byte address 0x4 - core index']
  #allocation1 [shape = 'u32[144,128]{1,0:T(1,128)}', space=vmem, size = 0x12000, scoped, tag = 'internal scratch']
  %s0 = inlined_call_operand.hbm [shape: bf16[8,128], index: 0, kind: input, shape index: {}]
  %s1 = inlined_call_operand.hbm [shape: bf16[128,128], index: 1, kind: input, shape index: {}]
  %s2 = inlined_call_operand.vmem [shape: f32[1,128], index: 2, kind: input, shape index: {}]
  %s3 = inlined_call_operand.hbm [shape: bf16[128,128], index: 3, kind: input, shape index: {}]
  %s4 = inlined_call_operand.vmem [shape: f32[1,128], index: 4, kind: input, shape index: {}]
  %s5 = inlined_call_operand.hbm [shape: f32[8,128], index: 5, kind: output, shape index: {}]
  %s6 = sld [smem:[#allocation0]]
  $region42: #{tpu_custom_call.1} parent=0
    _
  %s8 = ssub.s32 1, %s6
  %s9 = scalar_select 0, %s8, %s6
  $region1: #{tpu_custom_call.1} parent=0
    #allocation2 [shape = 'u8[2048]{0}', space=vmem, size = 0x800, scoped, tag = 'input window, operand 0, single buffered']
    #allocation3 [shape = 's32[1]{0}', space=sflag, size = 0x4, scoped, tag = 'scoped memory for tpu_custom_call.1']
    #allocation4 [shape = 's32[1]{0}', space=sflag, size = 0x4, scoped, tag = 'scoped memory for tpu_custom_call.1']
    #allocation5 [shape = 'u8[32768]{0}', space=vmem, size = 0x8000, scoped, tag = 'input window, operand 1, single buffered']
    #allocation6 [shape = 's32[1]{0}', space=sflag, size = 0x4, scoped, tag = 'scoped memory for tpu_custom_call.1']
    #allocation7 [shape = 'u8[32768]{0}', space=vmem, size = 0x8000, scoped, tag = 'input window, operand 3, single buffered']
    #allocation8 [shape = 'u8[4096]{0}', space=vmem, size = 0x1000, scoped, tag = 'output window, operand 0, single buffered']
    %10 = vsyncpa [#allocation3], 0
    %11 = vsyncpa [#allocation6], 0
    %12 = vsyncpa [#allocation4], 0
    // Predicated region
    $region2: #{tpu_custom_call.1} parent=1 // pred_check
      _
    $region3: #{tpu_custom_call.1} parent=1 // pred_check_branch
      %14 = sbr.rel (0) target = $region5
    $region4: #{tpu_custom_call.1} parent=1 // pred_region
      %s16 = ssub.s32 64, 64
      %17 = vsyncadd [#allocation3], %s16
      %s19 = sshll.u32 [#allocation2], 4
      %s20 = int_to_ptr.vmem [resolvable:$true] %s19
      %22 = dma.hbm_to_vmem [thread:$0]  %s0, 64, %s20, [#allocation3]
    $region5: #{tpu_custom_call.1} parent=1 // pred_fallthru
      _
    // Predicated region
    $region6: #{tpu_custom_call.1} parent=1 // pred_check
      _
    $region7: #{tpu_custom_call.1} parent=1 // pred_check_branch
      %24 = sbr.rel (0) target = $region9
    $region8: #{tpu_custom_call.1} parent=1 // pred_region
      %s26 = ssub.s32 1024, 1024
      %27 = vsyncadd [#allocation6], %s26
      %s28 = sshll.u32 [#allocation5], 4
      %s29 = int_to_ptr.vmem [resolvable:$true] %s28
      %34 = dma.hbm_to_vmem [thread:$0]  %s1, 1024, %s29, [#allocation6], 64, 64, 4
    $region9: #{tpu_custom_call.1} parent=1 // pred_fallthru
      _
    // Predicated region
    $region10: #{tpu_custom_call.1} parent=1 // pred_check
      _
    $region11: #{tpu_custom_call.1} parent=1 // pred_check_branch
      %36 = sbr.rel (0) target = $region13
    $region12: #{tpu_custom_call.1} parent=1 // pred_region
      _
    $region13: #{tpu_custom_call.1} parent=1 // pred_fallthru
      _
    // Predicated region
    $region14: #{tpu_custom_call.1} parent=1 // pred_check
      _
    $region15: #{tpu_custom_call.1} parent=1 // pred_check_branch
      %38 = sbr.rel (0) target = $region17
    $region16: #{tpu_custom_call.1} parent=1 // pred_region
      %s40 = ssub.s32 1024, 1024
      %41 = vsyncadd [#allocation6], %s40
      %s42 = sshll.u32 [#allocation7], 4
      %s43 = int_to_ptr.vmem [resolvable:$true] %s42
      %48 = dma.hbm_to_vmem [thread:$0]  %s3, 1024, %s43, [#allocation6], 64, 64, 4
    $region17: #{tpu_custom_call.1} parent=1 // pred_fallthru
      _
    // Predicated region
    $region18: #{tpu_custom_call.1} parent=1 // pred_check
      _
    $region19: #{tpu_custom_call.1} parent=1 // pred_check_branch
      %50 = sbr.rel (0) target = $region21
    $region20: #{tpu_custom_call.1} parent=1 // pred_region
      _
    $region21: #{tpu_custom_call.1} parent=1 // pred_fallthru
      _
    // Predicated region
    $region22: #{tpu_custom_call.1} parent=1 // pred_check
      _
    $region23: #{tpu_custom_call.1} parent=1 // pred_check_branch
      %52 = sbr.rel (0) target = $region25
    $region24: #{tpu_custom_call.1} parent=1 // pred_region
      %53 = dma.done [#allocation3], 64
    $region25: #{tpu_custom_call.1} parent=1 // pred_fallthru
      _
    // Predicated region
    $region26: #{tpu_custom_call.1} parent=1 // pred_check
      _
    $region27: #{tpu_custom_call.1} parent=1 // pred_check_branch
      %55 = sbr.rel (0) target = $region29
    $region28: #{tpu_custom_call.1} parent=1 // pred_region
      %56 = dma.done [#allocation6], 1024
    $region29: #{tpu_custom_call.1} parent=1 // pred_fallthru
      _
    // Predicated region
    $region30: #{tpu_custom_call.1} parent=1 // pred_check
      _
    $region31: #{tpu_custom_call.1} parent=1 // pred_check_branch
      %58 = sbr.rel (0) target = $region33
    $region32: #{tpu_custom_call.1} parent=1 // pred_region
      %59 = dma.done [#allocation6], 1024
    $region33: #{tpu_custom_call.1} parent=1 // pred_fallthru
      _
    %v61 = vld [vmem:[#allocation2] sm:$0xf]
    %v62 = vld [vmem:[#allocation5] sm:$0xf]
    %v63 = vld [vmem:[#allocation5 + $0x4] sm:$0xf]
    %v64 = vld [vmem:[#allocation5 + $0x8] sm:$0xf]
    %v65 = vld [vmem:[#allocation5 + $0xc] sm:$0xf]
    %v66 = vld [vmem:[#allocation5 + $0x10] sm:$0xf]
    %v67 = vld [vmem:[#allocation5 + $0x14] sm:$0xf]
    %v68 = vld [vmem:[#allocation5 + $0x18] sm:$0xf]
    %v69 = vld [vmem:[#allocation5 + $0x1c] sm:$0xf]
    %v70 = vld [vmem:[#allocation5 + $0x20] sm:$0xf]
    %v71 = vld [vmem:[#allocation5 + $0x24] sm:$0xf]
    %v72 = vld [vmem:[#allocation5 + $0x28] sm:$0xf]
    %v73 = vld [vmem:[#allocation5 + $0x2c] sm:$0xf]
    %v74 = vld [vmem:[#allocation5 + $0x30] sm:$0xf]
    %v75 = vld [vmem:[#allocation5 + $0x34] sm:$0xf]
    %v76 = vld [vmem:[#allocation5 + $0x38] sm:$0xf]
    %v77 = vld [vmem:[#allocation5 + $0x3c] sm:$0xf]
    %v78 = vld [vmem:[%s2] sm:$0x1]
    %v80 = vlaneseq
    %v81 = vshrl.u32 %v80, 7
    %v82 = vsub.s32 0, %v81
    %v83 = vrot.slane %v78, %v82
    %v101 = vunpack.c.l.b16 %v62
    %v102 = vunpack.c.l.b16 %v63
    %v103 = vunpack.c.l.b16 %v64
    %v104 = vunpack.c.l.b16 %v65
    %v105 = vunpack.c.l.b16 %v66
    %v106 = vunpack.c.l.b16 %v67
    %v107 = vunpack.c.l.b16 %v68
    %v108 = vunpack.c.l.b16 %v69
    %v109 = vunpack.c.l.b16 %v70
    %v110 = vunpack.c.l.b16 %v71
    %v111 = vunpack.c.l.b16 %v72
    %v112 = vunpack.c.l.b16 %v73
    %v113 = vunpack.c.l.b16 %v74
    %v114 = vunpack.c.l.b16 %v75
    %v115 = vunpack.c.l.b16 %v76
    %v116 = vunpack.c.l.b16 %v77
    %v117 = vpack.c.b16 %v102, %v101
    %v118 = vpack.c.b16 %v104, %v103
    %v119 = vpack.c.b16 %v106, %v105
    %v120 = vpack.c.b16 %v108, %v107
    %v121 = vpack.c.b16 %v110, %v109
    %v122 = vpack.c.b16 %v112, %v111
    %v123 = vpack.c.b16 %v114, %v113
    %v124 = vpack.c.b16 %v116, %v115
    %133 = vmatprep.subr.bf16.mxu0 0
    %134 = vmatpush1.bf16.msra.mxu0 %v117
    %135 = vmatprep.subr.bf16.mxu0 0
    %136 = vmatpush1.bf16.msra.mxu0 %v118
    %137 = vmatprep.subr.bf16.mxu0 0
    %138 = vmatpush1.bf16.msra.mxu0 %v119
    %139 = vmatprep.subr.bf16.mxu0 0
    %140 = vmatpush1.bf16.msra.mxu0 %v120
    %141 = vmatprep.subr.bf16.mxu0 0
    %142 = vmatpush1.bf16.msra.mxu0 %v121
    %143 = vmatprep.subr.bf16.mxu0 0
    %144 = vmatpush1.bf16.msra.mxu0 %v122
    %145 = vmatprep.subr.bf16.mxu0 0
    %146 = vmatpush1.bf16.msra.mxu0 %v123
    %147 = vmatprep.subr.bf16.mxu0 0
    %148 = vmatpush1.bf16.msra.mxu0 %v124
    %149 = vmatprep.subr.bf16.mxu0 0
    %150 = vmatpush1.bf16.msra.mxu0 0
    %151 = vmatprep.subr.bf16.mxu0 0
    %152 = vmatpush1.bf16.msra.mxu0 0
    %153 = vmatprep.subr.bf16.mxu0 0
    %154 = vmatpush1.bf16.msra.mxu0 0
    %155 = vmatprep.subr.bf16.mxu0 0
    %156 = vmatpush1.bf16.msra.mxu0 0
    %157 = vmatprep.subr.bf16.mxu0 0
    %158 = vmatpush1.bf16.msra.mxu0 0
    %159 = vmatprep.subr.bf16.mxu0 0
    %160 = vmatpush1.bf16.msra.mxu0 0
    %161 = vmatprep.subr.bf16.mxu0 0
    %162 = vmatpush1.bf16.msra.mxu0 0
    %163 = vmatprep.subr.bf16.mxu0 0
    %164 = vmatpush1.bf16.msra.mxu0 0
    %165 = vmatprep.mubr.bf16.mxu0 0
    %166 = vmatmul.mubr.bf16.gmra.mrb[0].mxu0 %v61
    %v167 = vpop.f32.mrb[0].mxu0
    %v168 = vadd.f32 %v83, %v167
    %v169 = vpop.f32.mrb[0].mxu0
    %v170 = vpop.f32.mrb[0].mxu0
    %v171 = vpop.f32.mrb[0].mxu0
    %172 = vdwg.mxu0
    %v173 = vmax.f32 %v168, 0.0
    %v174 = vld [vmem:[#allocation7] sm:$0xf]
    %v175 = vld [vmem:[#allocation7 + $0x4] sm:$0xf]
    %v176 = vld [vmem:[#allocation7 + $0x8] sm:$0xf]
    %v177 = vld [vmem:[#allocation7 + $0xc] sm:$0xf]
    %v178 = vld [vmem:[#allocation7 + $0x10] sm:$0xf]
    %v179 = vld [vmem:[#allocation7 + $0x14] sm:$0xf]
    %v180 = vld [vmem:[#allocation7 + $0x18] sm:$0xf]
    %v181 = vld [vmem:[#allocation7 + $0x1c] sm:$0xf]
    %v182 = vld [vmem:[#allocation7 + $0x20] sm:$0xf]
    %v183 = vld [vmem:[#allocation7 + $0x24] sm:$0xf]
    %v184 = vld [vmem:[#allocation7 + $0x28] sm:$0xf]
    %v185 = vld [vmem:[#allocation7 + $0x2c] sm:$0xf]
    %v186 = vld [vmem:[#allocation7 + $0x30] sm:$0xf]
    %v187 = vld [vmem:[#allocation7 + $0x34] sm:$0xf]
    %v188 = vld [vmem:[#allocation7 + $0x38] sm:$0xf]
    %v189 = vld [vmem:[#allocation7 + $0x3c] sm:$0xf]
    %v190 = vld [vmem:[%s4] sm:$0x1]
    %v191 = vpack.c.bf16 %v173, %v173
    %v193 = vlaneseq
    %v194 = vshrl.u32 %v193, 7
    %v195 = vsub.s32 0, %v194
    %v196 = vrot.slane %v190, %v195
    %v214 = vunpack.c.l.b16 %v174
    %v215 = vunpack.c.l.b16 %v175
    %v216 = vunpack.c.l.b16 %v176
    %v217 = vunpack.c.l.b16 %v177
    %v218 = vunpack.c.l.b16 %v178
    %v219 = vunpack.c.l.b16 %v179
    %v220 = vunpack.c.l.b16 %v180
    %v221 = vunpack.c.l.b16 %v181
    %v222 = vunpack.c.l.b16 %v182
    %v223 = vunpack.c.l.b16 %v183
    %v224 = vunpack.c.l.b16 %v184
    %v225 = vunpack.c.l.b16 %v185
    %v226 = vunpack.c.l.b16 %v186
    %v227 = vunpack.c.l.b16 %v187
    %v228 = vunpack.c.l.b16 %v188
    %v229 = vunpack.c.l.b16 %v189
    %v230 = vpack.c.b16 %v215, %v214
    %v231 = vpack.c.b16 %v217, %v216
    %v232 = vpack.c.b16 %v219, %v218
    %v233 = vpack.c.b16 %v221, %v220
    %v234 = vpack.c.b16 %v223, %v222
    %v235 = vpack.c.b16 %v225, %v224
    %v236 = vpack.c.b16 %v227, %v226
    %v237 = vpack.c.b16 %v229, %v228
    %246 = vmatprep.subr.bf16.mxu0 0
    %247 = vmatpush1.bf16.msra.mxu0 %v230
    %248 = vmatprep.subr.bf16.mxu0 0
    %249 = vmatpush1.bf16.msra.mxu0 %v231
    %250 = vmatprep.subr.bf16.mxu0 0
    %251 = vmatpush1.bf16.msra.mxu0 %v232
    %252 = vmatprep.subr.bf16.mxu0 0
    %253 = vmatpush1.bf16.msra.mxu0 %v233
    %254 = vmatprep.subr.bf16.mxu0 0
    %255 = vmatpush1.bf16.msra.mxu0 %v234
    %256 = vmatprep.subr.bf16.mxu0 0
    %257 = vmatpush1.bf16.msra.mxu0 %v235
    %258 = vmatprep.subr.bf16.mxu0 0
    %259 = vmatpush1.bf16.msra.mxu0 %v236
    %260 = vmatprep.subr.bf16.mxu0 0
    %261 = vmatpush1.bf16.msra.mxu0 %v237
    %262 = vmatprep.subr.bf16.mxu0 0
    %263 = vmatpush1.bf16.msra.mxu0 0
    %264 = vmatprep.subr.bf16.mxu0 0
    %265 = vmatpush1.bf16.msra.mxu0 0
    %266 = vmatprep.subr.bf16.mxu0 0
    %267 = vmatpush1.bf16.msra.mxu0 0
    %268 = vmatprep.subr.bf16.mxu0 0
    %269 = vmatpush1.bf16.msra.mxu0 0
    %270 = vmatprep.subr.bf16.mxu0 0
    %271 = vmatpush1.bf16.msra.mxu0 0
    %272 = vmatprep.subr.bf16.mxu0 0
    %273 = vmatpush1.bf16.msra.mxu0 0
    %274 = vmatprep.subr.bf16.mxu0 0
    %275 = vmatpush1.bf16.msra.mxu0 0
    %276 = vmatprep.subr.bf16.mxu0 0
    %277 = vmatpush1.bf16.msra.mxu0 0
    %278 = vmatprep.mubr.bf16.mxu0 0
    %279 = vmatmul.mubr.bf16.gmra.mrb[0].mxu0 %v191
    %v280 = vpop.f32.mrb[0].mxu0
    %v281 = vadd.f32 %v196, %v280
    %v282 = vpop.f32.mrb[0].mxu0
    %v283 = vpop.f32.mrb[0].mxu0
    %v284 = vpop.f32.mrb[0].mxu0
    %285 = vdwg.mxu0
    %v286 = vsub.f32 0.0, %v281
    %v287 = vmul.f32 %v286, 1.442695
    %v288 = vpow.pop %v287
    %v289 = vadd.f32 %v288, 1.0
    %v290 = vrcp.pop %v289
    %291 = vst [vmem:[#allocation8] sm:$0xff] %v290
    // Predicated region
    $region34: #{tpu_custom_call.1} parent=1 // pred_check
      _
    $region35: #{tpu_custom_call.1} parent=1 // pred_check_branch
      %293 = sbr.rel (0) target = $region37
    $region36: #{tpu_custom_call.1} parent=1 // pred_region
      %s295 = ssub.s32 128, 128
      %296 = vsyncadd [#allocation4], %s295
      %s298 = sshll.u32 [#allocation8], 4
      %s299 = int_to_ptr.vmem [resolvable:$true] %s298
      %301 = dma.vmem_to_hbm [thread:$0]  %s299, 128, %s5, [#allocation4]
    $region37: #{tpu_custom_call.1} parent=1 // pred_fallthru
      _
    // Predicated region
    $region38: #{tpu_custom_call.1} parent=1 // pred_check
      _
    $region39: #{tpu_custom_call.1} parent=1 // pred_check_branch
      %303 = sbr.rel (0) target = $region41
    $region40: #{tpu_custom_call.1} parent=1 // pred_region
      %304 = dma.done [#allocation4], 128
    $region41: #{tpu_custom_call.1} parent=1 // pred_fallthru
      _
    %305 = vsyncpa [#allocation3], 1
    %306 = vsyncpa [#allocation6], 1
    %307 = vsyncpa [#allocation4], 1

</llo_original>
